<compile_context>
chip_gen: v7x
topology: tpu7x:2x2x1
jax: 0.10.0
libtpu: 0.0.40
codegen_flags: <defaults>
</compile_context>

<pallas_src>
import functools

import jax
import jax.numpy as jnp
from jax.experimental import pallas as pl
from jax.experimental.pallas import tpu as pltpu


def _fused_conv_bn_kernel(cols_ref, w_ref, gamma_ref, beta_ref, o_ref, *,
                          n, m, eps):
    """One fused step: conv (single MXU dot) -> batch stats -> BN affine.

    cols_ref : (K, N*M)   ReLU'd im2col, all images concatenated on the lane axis
    w_ref    : (Cout, K)  conv weights, taps x channels flattened on K
    gamma_ref/beta_ref : (Cout, 1)
    o_ref    : (N, Cout, M)  lane-dense per-image output tiles
    """
    # Single MXU contraction for the whole batch: (Cout, K) x (K, N*M).
    conv = jnp.dot(w_ref[...], cols_ref[...],
                   preferred_element_type=jnp.float32)          # (Cout, N*M)

    # Training-mode batch statistics over (N, OH, OW) == the lane axis.
    inv_count = 1.0 / (n * m)
    mean = jnp.sum(conv, axis=1, keepdims=True) * inv_count      # (Cout, 1)
    centered = conv - mean
    var = jnp.sum(centered * centered, axis=1, keepdims=True) * inv_count
    scale = gamma_ref[...] * jax.lax.rsqrt(var + eps)             # EUP rsqrt
    shift = beta_ref[...]

    out = centered * scale + shift                                # (Cout, N*M)

    # Static, 128-aligned per-image stores (m is a multiple of 128 here).
    for b in range(n):
        o_ref[b] = out[:, b * m:(b + 1) * m]


@functools.partial(jax.jit, static_argnames=("padding",))
def conv_block_forward(x, weight, bias, gamma, beta, *, padding=1):
    """ReLU -> Conv2d(stride=1) -> BatchNorm2d (training-mode batch stats).

    x:      (N, Cin, H, W)      float32, NCHW
    weight: (Cout, Cin, KH, KW) float32
    bias:   (Cout,)             float32 (cancelled exactly by the BN mean)
    gamma/beta: (Cout,)         float32
    returns (N, Cout, OH, OW)   float32, NCHW
    """
    del bias  # mathematically cancelled by the BN mean subtraction (train mode)
    n, cin, h, w = x.shape
    cout, _, kh, kw = weight.shape
    oh = h + 2 * padding - kh + 1
    ow = w + 2 * padding - kw + 1
    m = oh * ow
    k_dim = kh * kw * cin

    # Wrapper-side ReLU (once per element) + zero padding + full im2col.
    xr = jnp.maximum(x, 0.0)
    xp = jnp.pad(xr, ((0, 0), (0, 0), (padding, padding), (padding, padding)))
    patches = [xp[:, :, i:i + oh, j:j + ow]          # each (N, Cin, OH, OW)
               for i in range(kh) for j in range(kw)]
    cols = jnp.stack(patches, axis=0)                 # (KH*KW, N, Cin, OH, OW)
    cols = cols.transpose(0, 2, 1, 3, 4).reshape(k_dim, n * m)   # (K, N*M)

    # Weights in matching (Cout, (i,j,ci)) order.
    w2 = weight.transpose(0, 2, 3, 1).reshape(cout, k_dim)        # (Cout, K)

    kernel = functools.partial(_fused_conv_bn_kernel, n=n, m=m, eps=1e-5)
    y = pl.pallas_call(
        kernel,
        out_shape=jax.ShapeDtypeStruct((n, cout, m), jnp.float32),
        grid_spec=pltpu.PrefetchScalarGridSpec(
            num_scalar_prefetch=0,
            grid=(1,),
            in_specs=[
                pl.BlockSpec((k_dim, n * m), lambda i: (0, 0)),
                pl.BlockSpec((cout, k_dim), lambda i: (0, 0)),
                pl.BlockSpec((cout, 1), lambda i: (0, 0)),
                pl.BlockSpec((cout, 1), lambda i: (0, 0)),
            ],
            out_specs=pl.BlockSpec((n, cout, m), lambda i: (0, 0, 0))),
        compiler_params=pltpu.CompilerParams(
            dimension_semantics=("arbitrary",)),
    )(cols, w2, gamma.reshape(cout, 1), beta.reshape(cout, 1))

    # (N, Cout, OH*OW) -> (N, Cout, OH, OW): free row-major reshape (NCHW).
    return y.reshape(n, cout, oh, ow)


def _reference(x, weight, bias, gamma, beta, padding=1):
    # Keeps the conv bias on purpose: it must cancel against the BN mean.
    xr = jnp.maximum(x, 0.0)
    y = jax.lax.conv_general_dilated(
        xr, weight, window_strides=(1, 1),
        padding=[(padding, padding), (padding, padding)],
        dimension_numbers=("NCHW", "OIHW", "NCHW"),
    ) + bias.reshape(1, -1, 1, 1)
    mean = jnp.mean(y, axis=(0, 2, 3), keepdims=True)
    var = jnp.mean((y - mean) ** 2, axis=(0, 2, 3), keepdims=True)
    return (gamma.reshape(1, -1, 1, 1) * (y - mean) * jax.lax.rsqrt(var + 1e-5)
            + beta.reshape(1, -1, 1, 1))


if __name__ == "__main__":
    # conv_block(in_channels=4, out_channels=8, kernel_size=3, padding=1)
    N, CIN, H, W = 2, 4, 16, 16
    COUT, KH, KW, PAD = 8, 3, 3, 1

    key = jax.random.PRNGKey(0)
    kx, kw_, kb = jax.random.split(key, 3)
    x = jax.random.normal(kx, (N, CIN, H, W), dtype=jnp.float32)
    weight = jax.random.normal(kw_, (COUT, CIN, KH, KW), dtype=jnp.float32) * 0.1
    bias = jax.random.normal(kb, (COUT,), dtype=jnp.float32) * 0.1
    gamma = jnp.ones((COUT,), dtype=jnp.float32)   # PyTorch BatchNorm2d defaults
    beta = jnp.zeros((COUT,), dtype=jnp.float32)

    out = conv_block_forward(x, weight, bias, gamma, beta, padding=PAD)
    out = jax.block_until_ready(out)

    ref = _reference(x, weight, bias, gamma, beta, padding=PAD)
    assert out.shape == (N, COUT, H, W)
    assert jnp.allclose(out, ref, atol=1e-3, rtol=1e-3), \
        float(jnp.max(jnp.abs(out - ref)))

    print("KERNEL_OK")
</pallas_src>

<mosaic_0001>
module attributes {stable_mosaic.version = 11 : i64} {
  func.func @_fused_conv_bn_kernel(%arg0: i32, %arg1: memref<36x512xf32, #tpu.memory_space<vmem>>, %arg2: memref<8x36xf32, #tpu.memory_space<vmem>>, %arg3: memref<8x1xf32, #tpu.memory_space<vmem>>, %arg4: memref<8x1xf32, #tpu.memory_space<vmem>>, %arg5: memref<2x8x256xf32, #tpu.memory_space<vmem>>) attributes {dimension_semantics = [#tpu.dimension_semantics<arbitrary>], iteration_bounds = array<i64: 1>, scalar_prefetch = 0 : i64, scratch_operands = 0 : i64, tpu.core_type = #tpu.core_type<tc>, window_params = [{pipeline_mode = #tpu.pipeline_mode<synchronous>, transform_indices = @transform_0, window_bounds = array<i64: 36, 512>}, {pipeline_mode = #tpu.pipeline_mode<synchronous>, transform_indices = @transform_1, window_bounds = array<i64: 8, 36>}, {pipeline_mode = #tpu.pipeline_mode<synchronous>, transform_indices = @transform_2, window_bounds = array<i64: 8, 1>}, {pipeline_mode = #tpu.pipeline_mode<synchronous>, transform_indices = @transform_3, window_bounds = array<i64: 8, 1>}, {pipeline_mode = #tpu.pipeline_mode<synchronous>, transform_indices = @transform_4, window_bounds = array<i64: 2, 8, 256>}]} {
    %c0 = arith.constant 0 : index
    %c0_0 = arith.constant 0 : index
    %0 = vector.load %arg2[%c0, %c0_0] : memref<8x36xf32, #tpu.memory_space<vmem>>, vector<8x36xf32>
    %c0_1 = arith.constant 0 : index
    %c0_2 = arith.constant 0 : index
    %1 = vector.load %arg1[%c0_1, %c0_2] : memref<36x512xf32, #tpu.memory_space<vmem>>, vector<36x512xf32>
    %cst = arith.constant dense<0.000000e+00> : vector<8x512xf32>
    %2 = tpu.matmul %0, %1, %cst {dimension_numbers = #tpu.dot_dimension_numbers<[1], [0], [0], [1], [0, 0, 1, 1], [], []>} : vector<8x36xf32>, vector<36x512xf32>, vector<8x512xf32> -> vector<8x512xf32>
    %cst_3 = arith.constant dense<0.000000e+00> : vector<8xf32>
    %3 = vector.multi_reduction <add>, %2, %cst_3 [1] : vector<8x512xf32> to vector<8xf32>
    %4 = vector.shape_cast %3 : vector<8xf32> to vector<8x1xf32>
    %cst_4 = arith.constant 0.001953125 : f32
    %5 = vector.broadcast %cst_4 : f32 to vector<8x1xf32>
    %6 = arith.mulf %4, %5 : vector<8x1xf32>
    %7 = vector.broadcast %6 : vector<8x1xf32> to vector<8x512xf32>
    %8 = arith.subf %2, %7 : vector<8x512xf32>
    %9 = arith.mulf %8, %8 : vector<8x512xf32>
    %cst_5 = arith.constant dense<0.000000e+00> : vector<8xf32>
    %10 = vector.multi_reduction <add>, %9, %cst_5 [1] : vector<8x512xf32> to vector<8xf32>
    %11 = vector.shape_cast %10 : vector<8xf32> to vector<8x1xf32>
    %cst_6 = arith.constant 0.001953125 : f32
    %12 = vector.broadcast %cst_6 : f32 to vector<8x1xf32>
    %13 = arith.mulf %11, %12 : vector<8x1xf32>
    %c0_7 = arith.constant 0 : index
    %c0_8 = arith.constant 0 : index
    %14 = vector.load %arg3[%c0_7, %c0_8] : memref<8x1xf32, #tpu.memory_space<vmem>>, vector<8x1xf32>
    %cst_9 = arith.constant 9.99999974E-6 : f32
    %15 = vector.broadcast %cst_9 : f32 to vector<8x1xf32>
    %16 = arith.addf %13, %15 : vector<8x1xf32>
    %17 = math.rsqrt %16 : vector<8x1xf32>
    %18 = arith.mulf %14, %17 : vector<8x1xf32>
    %c0_10 = arith.constant 0 : index
    %c0_11 = arith.constant 0 : index
    %19 = vector.load %arg4[%c0_10, %c0_11] : memref<8x1xf32, #tpu.memory_space<vmem>>, vector<8x1xf32>
    %20 = vector.broadcast %18 : vector<8x1xf32> to vector<8x512xf32>
    %21 = arith.mulf %8, %20 : vector<8x512xf32>
    %22 = vector.broadcast %19 : vector<8x1xf32> to vector<8x512xf32>
    %23 = arith.addf %21, %22 : vector<8x512xf32>
    %24 = vector.extract_strided_slice %23 {offsets = [0, 0], sizes = [8, 256], strides = [1, 1]} : vector<8x512xf32> to vector<8x256xf32>
    %c0_12 = arith.constant 0 : index
    %c0_13 = arith.constant 0 : index
    %c0_14 = arith.constant 0 : index
    %25 = vector.load %arg5[%c0_12, %c0_13, %c0_14] : memref<2x8x256xf32, #tpu.memory_space<vmem>>, vector<1x8x256xf32>
    %26 = vector.shape_cast %25 : vector<1x8x256xf32> to vector<8x256xf32>
    %27 = vector.shape_cast %24 : vector<8x256xf32> to vector<1x8x256xf32>
    tpu.vector_store %arg5[%c0_12, %c0_13, %c0_14], %27 {strides = array<i32>} : memref<2x8x256xf32, #tpu.memory_space<vmem>>, vector<1x8x256xf32>,
    %28 = vector.extract_strided_slice %23 {offsets = [0, 256], sizes = [8, 256], strides = [1, 1]} : vector<8x512xf32> to vector<8x256xf32>
    %c1 = arith.constant 1 : index
    %c0_15 = arith.constant 0 : index
    %c0_16 = arith.constant 0 : index
    %29 = vector.load %arg5[%c1, %c0_15, %c0_16] : memref<2x8x256xf32, #tpu.memory_space<vmem>>, vector<1x8x256xf32>
    %30 = vector.shape_cast %29 : vector<1x8x256xf32> to vector<8x256xf32>
    %31 = vector.shape_cast %28 : vector<8x256xf32> to vector<1x8x256xf32>
    tpu.vector_store %arg5[%c1, %c0_15, %c0_16], %31 {strides = array<i32>} : memref<2x8x256xf32, #tpu.memory_space<vmem>>, vector<1x8x256xf32>,
    return
  }
  func.func @transform_0(%arg0: i32) -> (i32, i32) {
    %c0_i32 = arith.constant 0 : i32
    %c0_i32_0 = arith.constant 0 : i32
    %c0_i32_1 = arith.constant 0 : i32
    return %c0_i32, %c0_i32_0 : i32, i32
  }
  func.func @transform_1(%arg0: i32) -> (i32, i32) {
    %c0_i32 = arith.constant 0 : i32
    %c0_i32_0 = arith.constant 0 : i32
    %c0_i32_1 = arith.constant 0 : i32
    return %c0_i32, %c0_i32_0 : i32, i32
  }
  func.func @transform_2(%arg0: i32) -> (i32, i32) {
    %c0_i32 = arith.constant 0 : i32
    %c0_i32_0 = arith.constant 0 : i32
    %c0_i32_1 = arith.constant 0 : i32
    return %c0_i32, %c0_i32_0 : i32, i32
  }
  func.func @transform_3(%arg0: i32) -> (i32, i32) {
    %c0_i32 = arith.constant 0 : i32
    %c0_i32_0 = arith.constant 0 : i32
    %c0_i32_1 = arith.constant 0 : i32
    return %c0_i32, %c0_i32_0 : i32, i32
  }
  func.func @transform_4(%arg0: i32) -> (i32, i32, i32) {
    %c0_i32 = arith.constant 0 : i32
    %c0_i32_0 = arith.constant 0 : i32
    %c0_i32_1 = arith.constant 0 : i32
    %c0_i32_2 = arith.constant 0 : i32
    return %c0_i32, %c0_i32_0, %c0_i32_1 : i32, i32, i32
  }
}

</mosaic_0001>

<llo_original>
// kernel: conv_block_forward.1
$region0: #{conv_block_forward.1}
  #allocation0 [shape = 'u32[]', space=smem, size = 0x4, offset = 0x4, fixed_abs, tag = 'smem constant byte address 0x4 - core index']
  #allocation1 [shape = 'u32[144,128]{1,0:T(1,128)}', space=vmem, size = 0x12000, scoped, tag = 'internal scratch']
  %s0 = inlined_call_operand.vmem [shape: f32[36,512], index: 0, kind: input, shape index: {}]
  %s1 = inlined_call_operand.vmem [shape: f32[8,36], index: 1, kind: input, shape index: {}]
  %s2 = inlined_call_operand.vmem [shape: f32[8,1], index: 2, kind: input, shape index: {}]
  %s3 = inlined_call_operand.vmem [shape: f32[8,1], index: 3, kind: input, shape index: {}]
  %s4 = inlined_call_operand.vmem [shape: f32[2,8,256], index: 4, kind: output, shape index: {}]
  %s5 = sld [smem:[#allocation0]]
  $region26: #{conv_block_forward.1} parent=0
    _
  %s7 = ssub.s32 1, %s5
  %s8 = scalar_select 0, %s7, %s5
  // Predicated region
  $region2: #{conv_block_forward.1} parent=0 // pred_check
    _
  $region3: #{conv_block_forward.1} parent=0 // pred_check_branch
    %10 = sbr.rel (0) target = $region5
  $region4: #{conv_block_forward.1} parent=0 // pred_region
    _
  $region5: #{conv_block_forward.1} parent=0 // pred_fallthru
    _
  // Predicated region
  $region6: #{conv_block_forward.1} parent=0 // pred_check
    _
  $region7: #{conv_block_forward.1} parent=0 // pred_check_branch
    %12 = sbr.rel (0) target = $region9
  $region8: #{conv_block_forward.1} parent=0 // pred_region
    _
  $region9: #{conv_block_forward.1} parent=0 // pred_fallthru
    _
  // Predicated region
  $region10: #{conv_block_forward.1} parent=0 // pred_check
    _
  $region11: #{conv_block_forward.1} parent=0 // pred_check_branch
    %14 = sbr.rel (0) target = $region13
  $region12: #{conv_block_forward.1} parent=0 // pred_region
    _
  $region13: #{conv_block_forward.1} parent=0 // pred_fallthru
    _
  // Predicated region
  $region14: #{conv_block_forward.1} parent=0 // pred_check
    _
  $region15: #{conv_block_forward.1} parent=0 // pred_check_branch
    %16 = sbr.rel (0) target = $region17
  $region16: #{conv_block_forward.1} parent=0 // pred_region
    _
  $region17: #{conv_block_forward.1} parent=0 // pred_fallthru
    _
  %v17 = vld [vmem:[%s1] sm:$0xff]
  %v18 = vld [vmem:[%s0] sm:$0xff]
  %v19 = vld [vmem:[%s0 + $0x8] sm:$0xff]
  %v20 = vld [vmem:[%s0 + $0x10] sm:$0xff]
  %v21 = vld [vmem:[%s0 + $0x18] sm:$0xff]
  %v22 = vld [vmem:[%s0 + $0x20] sm:$0xff]
  %v23 = vld [vmem:[%s0 + $0x28] sm:$0xff]
  %v24 = vld [vmem:[%s0 + $0x30] sm:$0xff]
  %v25 = vld [vmem:[%s0 + $0x38] sm:$0xff]
  %v26 = vld [vmem:[%s0 + $0x40] sm:$0xff]
  %v27 = vld [vmem:[%s0 + $0x48] sm:$0xff]
  %v28 = vld [vmem:[%s0 + $0x50] sm:$0xff]
  %v29 = vld [vmem:[%s0 + $0x58] sm:$0xff]
  %v30 = vld [vmem:[%s0 + $0x60] sm:$0xff]
  %v31 = vld [vmem:[%s0 + $0x68] sm:$0xff]
  %v32 = vld [vmem:[%s0 + $0x70] sm:$0xff]
  %v33 = vld [vmem:[%s0 + $0x78] sm:$0xff]
  %v34 = vld [vmem:[%s0 + $0x80] sm:$0xf]
  %v35 = vld [vmem:[%s0 + $0x88] sm:$0xf]
  %v36 = vld [vmem:[%s0 + $0x90] sm:$0xf]
  %v37 = vld [vmem:[%s0 + $0x98] sm:$0xf]
  %vm38 = vcmask 293888
  %v40 = vsel %vm38, %v17, 0
  %vm42 = vcmask 1043456
  %v44 = vsel %vm42, %v34, 0
  %v47 = vsel %vm42, %v35, 0
  %v50 = vsel %vm42, %v36, 0
  %v53 = vsel %vm42, %v37, 0
  %55 = vmatprep.subr.mxu0 %v19
  %56 = vmatpush1.msra.mxu0 %v18
  %57 = vmatprep.subr.mxu0 %v23
  %58 = vmatpush1.msra.mxu0 %v22
  %59 = vmatprep.subr.mxu0 %v27
  %60 = vmatpush1.msra.mxu0 %v26
  %61 = vmatprep.subr.mxu0 %v31
  %62 = vmatpush1.msra.mxu0 %v30
  %63 = vmatprep.subr.mxu0 %v47
  %64 = vmatpush1.msra.mxu0 %v44
  %65 = vmatprep.subr.mxu0 0.0
  %66 = vmatpush1.msra.mxu0 0.0
  %67 = vmatprep.subr.mxu0 0.0
  %68 = vmatpush1.msra.mxu0 0.0
  %69 = vmatprep.subr.mxu0 0.0
  %70 = vmatpush1.msra.mxu0 0.0
  %71 = vmatprep.subr.mxu0 0.0
  %72 = vmatpush1.msra.mxu0 0.0
  %73 = vmatprep.subr.mxu0 0.0
  %74 = vmatpush1.msra.mxu0 0.0
  %75 = vmatprep.subr.mxu0 0.0
  %76 = vmatpush1.msra.mxu0 0.0
  %77 = vmatprep.subr.mxu0 0.0
  %78 = vmatpush1.msra.mxu0 0.0
  %79 = vmatprep.subr.mxu0 0.0
  %80 = vmatpush1.msra.mxu0 0.0
  %81 = vmatprep.subr.mxu0 0.0
  %82 = vmatpush1.msra.mxu0 0.0
  %83 = vmatprep.subr.mxu0 0.0
  %84 = vmatpush1.msra.mxu0 0.0
  %85 = vmatprep.subr.mxu0 0.0
  %86 = vmatpush1.msra.mxu0 0.0
  %87 = vmatprep.subr.mxu0 0.0
  %88 = vmatpush1.msra.mxu0 0.0
  %89 = vmatprep.subr.mxu0 0.0
  %90 = vmatpush1.msra.mxu0 0.0
  %91 = vmatprep.subr.mxu0 0.0
  %92 = vmatpush1.msra.mxu0 0.0
  %93 = vmatprep.subr.mxu0 0.0
  %94 = vmatpush1.msra.mxu0 0.0
  %95 = vmatprep.subr.mxu0 0.0
  %96 = vmatpush1.msra.mxu0 0.0
  %97 = vmatprep.subr.mxu0 0.0
  %98 = vmatpush1.msra.mxu0 0.0
  %99 = vmatprep.subr.mxu0 0.0
  %100 = vmatpush1.msra.mxu0 0.0
  %101 = vmatprep.subr.mxu0 0.0
  %102 = vmatpush1.msra.mxu0 0.0
  %103 = vmatprep.subr.mxu0 0.0
  %104 = vmatpush1.msra.mxu0 0.0
  %105 = vmatprep.subr.mxu0 0.0
  %106 = vmatpush1.msra.mxu0 0.0
  %107 = vmatprep.subr.mxu0 0.0
  %108 = vmatpush1.msra.mxu0 0.0
  %109 = vmatprep.subr.mxu0 0.0
  %110 = vmatpush1.msra.mxu0 0.0
  %111 = vmatprep.subr.mxu0 0.0
  %112 = vmatpush1.msra.mxu0 0.0
  %113 = vmatprep.subr.mxu0 0.0
  %114 = vmatpush1.msra.mxu0 0.0
  %115 = vmatprep.subr.mxu0 0.0
  %116 = vmatpush1.msra.mxu0 0.0
  %117 = vmatprep.subr.mxu0 0.0
  %118 = vmatpush1.msra.mxu0 0.0
  %119 = vmatprep.mubr.f32.mxu0 0.0
  %120 = vmatmul.mubr.f32.gmra.mrb[0].mxu0 %v40
  %v121 = vpop.f32.mrb[0].mxu0
  %v122 = vadd.f32 0.0, %v121
  %v123 = vpop.f32.mrb[0].mxu0
  %v124 = vadd.f32 0.0, %v123
  %125 = vdwg.mxu0
  %126 = vmatprep.subr.mxu0 %v21
  %127 = vmatpush1.msra.mxu0 %v20
  %128 = vmatprep.subr.mxu0 %v25
  %129 = vmatpush1.msra.mxu0 %v24
  %130 = vmatprep.subr.mxu0 %v29
  %131 = vmatpush1.msra.mxu0 %v28
  %132 = vmatprep.subr.mxu0 %v33
  %133 = vmatpush1.msra.mxu0 %v32
  %134 = vmatprep.subr.mxu0 %v53
  %135 = vmatpush1.msra.mxu0 %v50
  %136 = vmatprep.subr.mxu0 0.0
  %137 = vmatpush1.msra.mxu0 0.0
  %138 = vmatprep.subr.mxu0 0.0
  %139 = vmatpush1.msra.mxu0 0.0
  %140 = vmatprep.subr.mxu0 0.0
  %141 = vmatpush1.msra.mxu0 0.0
  %142 = vmatprep.subr.mxu0 0.0
  %143 = vmatpush1.msra.mxu0 0.0
  %144 = vmatprep.subr.mxu0 0.0
  %145 = vmatpush1.msra.mxu0 0.0
  %146 = vmatprep.subr.mxu0 0.0
  %147 = vmatpush1.msra.mxu0 0.0
  %148 = vmatprep.subr.mxu0 0.0
  %149 = vmatpush1.msra.mxu0 0.0
  %150 = vmatprep.subr.mxu0 0.0
  %151 = vmatpush1.msra.mxu0 0.0
  %152 = vmatprep.subr.mxu0 0.0
  %153 = vmatpush1.msra.mxu0 0.0
  %154 = vmatprep.subr.mxu0 0.0
  %155 = vmatpush1.msra.mxu0 0.0
  %156 = vmatprep.subr.mxu0 0.0
  %157 = vmatpush1.msra.mxu0 0.0
  %158 = vmatprep.subr.mxu0 0.0
  %159 = vmatpush1.msra.mxu0 0.0
  %160 = vmatprep.subr.mxu0 0.0
  %161 = vmatpush1.msra.mxu0 0.0
  %162 = vmatprep.subr.mxu0 0.0
  %163 = vmatpush1.msra.mxu0 0.0
  %164 = vmatprep.subr.mxu0 0.0
  %165 = vmatpush1.msra.mxu0 0.0
  %166 = vmatprep.subr.mxu0 0.0
  %167 = vmatpush1.msra.mxu0 0.0
  %168 = vmatprep.subr.mxu0 0.0
  %169 = vmatpush1.msra.mxu0 0.0
  %170 = vmatprep.subr.mxu0 0.0
  %171 = vmatpush1.msra.mxu0 0.0
  %172 = vmatprep.subr.mxu0 0.0
  %173 = vmatpush1.msra.mxu0 0.0
  %174 = vmatprep.subr.mxu0 0.0
  %175 = vmatpush1.msra.mxu0 0.0
  %176 = vmatprep.subr.mxu0 0.0
  %177 = vmatpush1.msra.mxu0 0.0
  %178 = vmatprep.subr.mxu0 0.0
  %179 = vmatpush1.msra.mxu0 0.0
  %180 = vmatprep.subr.mxu0 0.0
  %181 = vmatpush1.msra.mxu0 0.0
  %182 = vmatprep.subr.mxu0 0.0
  %183 = vmatpush1.msra.mxu0 0.0
  %184 = vmatprep.subr.mxu0 0.0
  %185 = vmatpush1.msra.mxu0 0.0
  %186 = vmatprep.subr.mxu0 0.0
  %187 = vmatpush1.msra.mxu0 0.0
  %188 = vmatprep.subr.mxu0 0.0
  %189 = vmatpush1.msra.mxu0 0.0
  %190 = vmatprep.mubr.f32.mxu0 0.0
  %191 = vmatmul.mubr.f32.gmra.mrb[0].mxu0 %v40
  %v192 = vpop.f32.mrb[0].mxu0
  %v193 = vadd.f32 0.0, %v192
  %v194 = vpop.f32.mrb[0].mxu0
  %v195 = vadd.f32 0.0, %v194
  %196 = vdwg.mxu0
  %v197 = vadd.f32 %v122, %v124
  %v198 = vadd.f32 %v197, %v193
  %v199 = vadd.f32 %v198, %v195
  %200 = vadd.xlane.f32.xlu0 %v199
  %v201 = vpop.xlane.xlu0 %200
  %v202 = vmul.f32 %v201, 0.001953125
  %v203 = vsub.f32 %v122, %v202
  %v204 = vsub.f32 %v124, %v202
  %v205 = vsub.f32 %v193, %v202
  %v206 = vsub.f32 %v195, %v202
  %v207 = vmul.f32 %v203, %v203
  %v208 = vmul.f32 %v204, %v204
  %v209 = vmul.f32 %v205, %v205
  %v210 = vmul.f32 %v206, %v206
  %v211 = vadd.f32 %v207, %v208
  %v212 = vadd.f32 %v211, %v209
  %v213 = vadd.f32 %v212, %v210
  %214 = vadd.xlane.f32.xlu0 %v213
  %v215 = vpop.xlane.xlu0 %214
  %v216 = vmul.f32 %v215, 0.001953125
  %v217 = vld [vmem:[%s2] sm:$0xff]
  %v218 = vadd.f32 %v216, 1e-05
  %v219 = vrsqrt.pop %v218
  %v220 = vmul.f32 %v217, %v219
  %v221 = vld [vmem:[%s3] sm:$0xff]
  %223 = vset.pattern.permute.xlu0 0
  %224 = vperm.xlu0 %223, %v220
  %v225 = vpop.permute.xlu0 %224
  %v227 = vmul.f32 %v203, %v225
  %v228 = vmul.f32 %v204, %v225
  %v229 = vmul.f32 %v205, %v225
  %v230 = vmul.f32 %v206, %v225
  %232 = vset.pattern.permute.xlu0 0
  %233 = vperm.xlu0 %232, %v221
  %v234 = vpop.permute.xlu0 %233
  %v236 = vadd.f32 %v227, %v234
  %v237 = vadd.f32 %v228, %v234
  %v238 = vadd.f32 %v229, %v234
  %v239 = vadd.f32 %v230, %v234
  %240 = vst [vmem:[%s4] sm:$0xff] %v236
  %241 = vst [vmem:[%s4 + $0x8] sm:$0xff] %v237
  %s242 = scalar_lea.vmem %s4, 16
  %243 = vst [vmem:[%s242] sm:$0xff] %v238
  %244 = vst [vmem:[%s242 + $0x8] sm:$0xff] %v239
  // Predicated region
  $region18: #{conv_block_forward.1} parent=0 // pred_check
    _
  $region19: #{conv_block_forward.1} parent=0 // pred_check_branch
    %246 = sbr.rel (0) target = $region21
  $region20: #{conv_block_forward.1} parent=0 // pred_region
    _
  $region21: #{conv_block_forward.1} parent=0 // pred_fallthru
    _
  // Predicated region
  $region22: #{conv_block_forward.1} parent=0 // pred_check
    _
  $region23: #{conv_block_forward.1} parent=0 // pred_check_branch
    %248 = sbr.rel (0) target = $region25
  $region24: #{conv_block_forward.1} parent=0 // pred_region
    _
  $region25: #{conv_block_forward.1} parent=0 // pred_fallthru
    _

</llo_original>
